<compile_context>
chip_gen: v5e
topology: v5e:2x2
jax: 0.10.0
libtpu: 0.0.40
codegen_flags: <defaults>
</compile_context>

<pallas_src>
import jax
import jax.numpy as jnp
from jax import lax
from jax.experimental import pallas as pl
from jax.experimental.pallas import tpu as pltpu

# ---------------------------------------------------------------------------
# Model dimensions (small, TPU-tile friendly).
# ---------------------------------------------------------------------------
VOCAB = 64           # phoneme vocabulary
EMB = 128            # phoneme embedding dim
STYLE = 256          # style vector dim (matches [num_words, 256] in the module)
HIDDEN = 128         # synthesizer hidden dim
FRAME = 128          # audio samples generated per phoneme

_TP_LARGE = 1024         # max per-step tile for long utterances (multiple of 256)
_SINGLE_BLOCK_MAX = 256  # above this, split into >= 2 parallel steps (v7x: 2 TCs)


def _round_up(n, m):
    return ((n + m - 1) // m) * m


# ---------------------------------------------------------------------------
# Pallas kernel: the synthesizer hot path with fused gathers.
#
#   emb    = one_hot(ph_ids, VOCAB)  @ emb_table        [tp, EMB]    (bf16 MXU)
#   sproj  = one_hot(word_ids, Wpad) @ style_proj_tbl   [tp, HIDDEN] (b1 folded)
#   h      = tanh(emb @ W1 + sproj)                     [tp, HIDDEN] (f32)
#   frames = tanh(h @ Wout + bout)                      [tp, FRAME]  (f32)
#
# Padded rows carry id = -1 -> all-zero one-hot rows; they are trimmed by the
# caller (or masked by length-aware consumers of the padded output).
# ---------------------------------------------------------------------------
def synth_kernel(ph_ids_ref, w_ids_ref, emb_tbl_ref, sproj_tbl_ref,
                 w1_ref, wo_ref, bo_ref, out_ref):
    tp = ph_ids_ref.shape[0]
    ph_ids = ph_ids_ref[...]                                     # [tp, 1] i32
    w_ids = w_ids_ref[...]                                       # [tp, 1] i32

    # In-kernel embedding gather as a one-hot MXU matmul (table is 16 KiB,
    # grid-invariant VMEM).  Exact row select; f32 accumulation.
    vocab = emb_tbl_ref.shape[0]
    ph_onehot = (lax.broadcasted_iota(jnp.int32, (tp, vocab), 1)
                 == ph_ids).astype(jnp.bfloat16)
    emb = jnp.dot(ph_onehot, emb_tbl_ref[...],
                  preferred_element_type=jnp.float32)            # [tp, EMB]

    # In-kernel style gather: word-level projection (with b1 already folded)
    # selected per phoneme by word index.
    n_words = sproj_tbl_ref.shape[0]
    w_onehot = (lax.broadcasted_iota(jnp.int32, (tp, n_words), 1)
                == w_ids).astype(jnp.float32)
    sproj = jnp.dot(w_onehot, sproj_tbl_ref[...],
                    preferred_element_type=jnp.float32)          # [tp, HIDDEN]

    # Layer 1: bf16 MXU matmul, f32 accumulation; add + tanh stay in f32.
    h = jnp.tanh(
        jnp.dot(emb.astype(jnp.bfloat16), w1_ref[...],
                preferred_element_type=jnp.float32)
        + sproj)
    # Layer 2: expand each phoneme into FRAME audio samples.
    frames = jnp.tanh(
        jnp.dot(h.astype(jnp.bfloat16), wo_ref[...],
                preferred_element_type=jnp.float32)
        + bo_ref[...])
    out_ref[...] = frames.astype(out_ref.dtype)


def synth_frames(ph_ids, w_ids, style_proj, params, tp):
    """ph_ids/w_ids: [P_pad, 1] int32, style_proj: [W_pad, HIDDEN] f32
    -> frames [P_pad, FRAME] f32."""
    P_pad = ph_ids.shape[0]
    assert P_pad > 0 and P_pad % tp == 0
    W_pad = style_proj.shape[0]
    grid = (P_pad // tp,)

    w1, wo, bo, emb_tbl = params["w1"], params["wo"], params["bo"], params["emb_table"]

    # Advisory cost hint so XLA can overlap the word-level prologue matmul
    # with this call.
    cost = pl.CostEstimate(
        flops=2 * P_pad * (VOCAB * EMB + W_pad * HIDDEN
                           + EMB * HIDDEN + HIDDEN * FRAME),
        transcendentals=P_pad * (HIDDEN + FRAME),
        bytes_accessed=(ph_ids.size * 4 + w_ids.size * 4
                        + style_proj.size * 4 + emb_tbl.size * 2
                        + w1.size * 2 + wo.size * 2 + bo.size * 4
                        + P_pad * FRAME * 4),
    )

    return pl.pallas_call(
        synth_kernel,
        out_shape=jax.ShapeDtypeStruct((P_pad, FRAME), jnp.float32),
        grid_spec=pltpu.PrefetchScalarGridSpec(
            num_scalar_prefetch=0,
            grid=grid,
            in_specs=[
                # Per-step index blocks: ~8 B/phoneme of input traffic.
                pl.BlockSpec((tp, 1), lambda i: (i, 0)),
                pl.BlockSpec((tp, 1), lambda i: (i, 0)),
                # Grid-invariant tables / weights (tiny; default double
                # buffering costs < 200 KiB of VMEM total).
                pl.BlockSpec((VOCAB, EMB), lambda i: (0, 0)),
                pl.BlockSpec((W_pad, HIDDEN), lambda i: (0, 0)),
                pl.BlockSpec((EMB, HIDDEN), lambda i: (0, 0)),
                pl.BlockSpec((HIDDEN, FRAME), lambda i: (0, 0)),
                pl.BlockSpec((1, FRAME), lambda i: (0, 0)),
            ],
            out_specs=pl.BlockSpec((tp, FRAME), lambda i: (i, 0)),
        ),
        compiler_params=pltpu.CompilerParams(
            # Phoneme tiles are independent -> megacore-shardable on v7x.
            dimension_semantics=("parallel",)),
        cost_estimate=cost,
    )(ph_ids, w_ids, emb_tbl, style_proj, w1, wo, bo)


# ---------------------------------------------------------------------------
# Deterministic "KPipeline" glue: phonemize + parameter init.
# ---------------------------------------------------------------------------
def phonemize(text):
    """Deterministic stand-in for pipeline.phonemize: one phoneme per char."""
    words = text.split()
    phoneme_ids, word_idx = [], []
    for wi, word in enumerate(words):
        for ch in word:
            phoneme_ids.append(ord(ch) % VOCAB)
            word_idx.append(wi)
    return (jnp.array(phoneme_ids, dtype=jnp.int32),
            jnp.array(word_idx, dtype=jnp.int32))


def init_params(key):
    ks = jax.random.split(key, 4)
    scale = 0.05
    return {
        # MXU-path operands in bf16 (halves weight DMA bytes, 2x MXU rate on
        # v6e/v7x); style projection weights + biases in f32.
        "emb_table": (scale * jax.random.normal(ks[0], (VOCAB, EMB),
                                                jnp.float32)).astype(jnp.bfloat16),
        "w1": (scale * jax.random.normal(ks[1], (EMB, HIDDEN),
                                         jnp.float32)).astype(jnp.bfloat16),
        "ws": scale * jax.random.normal(ks[2], (STYLE, HIDDEN), jnp.float32),
        "b1": jnp.zeros((1, HIDDEN), jnp.float32),
        "wo": (scale * jax.random.normal(ks[3], (HIDDEN, FRAME),
                                         jnp.float32)).astype(jnp.bfloat16),
        "bo": jnp.zeros((1, FRAME), jnp.float32),
    }


def _pick_tile(num_phonemes):
    """Tile policy: one step for short texts; >= 2 parallel steps otherwise
    (v7x has 2 TensorCores), with per-step tiles up to _TP_LARGE rows."""
    if num_phonemes <= _SINGLE_BLOCK_MAX:
        return _round_up(num_phonemes, 16)          # bf16 sublane packing
    return min(_TP_LARGE, _round_up(-(-num_phonemes // 2), 256))


def kokoro_synthesize(text, style_features, params):
    """Hot path.  Returns (frames [P_pad, FRAME] f32, num_phonemes).

    Length-aware consumers should use this directly: returning the padded
    frames avoids the XLA epilogue copy that a trim-and-flatten would force.
    Padded rows (index -1) are deterministic garbage and must be masked by
    num_phonemes.
    """
    phoneme_ids, word_idx = phonemize(text)
    P = int(phoneme_ids.shape[0])
    if P == 0:                                      # empty / whitespace-only text
        return jnp.zeros((0, FRAME), jnp.float32), 0

    # Style conditioning hoisted to WORD granularity with b1 folded in:
    # one [W,256]@[256,128] matmul + bias, instead of any per-phoneme
    # K=256 work inside the kernel.
    W = int(style_features.shape[0])
    W_pad = _round_up(max(W, 1), 8)
    style_proj = jnp.dot(style_features.astype(jnp.float32), params["ws"],
                         preferred_element_type=jnp.float32) + params["b1"]
    if W_pad > W:
        style_proj = jnp.pad(style_proj, ((0, W_pad - W), (0, 0)))

    tp = _pick_tile(P)
    P_pad = _round_up(P, tp)

    # Index blocks shipped to the kernel; pad with -1 -> all-zero one-hot rows.
    ph_ids = jnp.full((P_pad, 1), -1, jnp.int32).at[:P, 0].set(phoneme_ids)
    w_ids = jnp.full((P_pad, 1), -1, jnp.int32).at[:P, 0].set(word_idx)

    frames = synth_frames(ph_ids, w_ids, style_proj, params, tp)  # [P_pad, FRAME]
    return frames, P


def kokoro_wrapper_forward(text, style_features, params):
    """Mirrors KokoroWrapper.forward: text + [num_words, 256] -> audio [T]."""
    frames, P = kokoro_synthesize(text, style_features, params)
    if P == 0:
        return jnp.zeros((0,), jnp.float32)
    # Trim + flatten only at the module boundary (the one remaining epilogue
    # copy; it is skipped entirely by consumers of kokoro_synthesize()).
    return frames[:P].reshape(-1)                                  # [P * FRAME]


# ---------------------------------------------------------------------------
# Pure-JAX reference (same dtype path) for a correctness check.
# ---------------------------------------------------------------------------
def reference_forward(text, style_features, params):
    phoneme_ids, word_idx = phonemize(text)
    if int(phoneme_ids.shape[0]) == 0:
        return jnp.zeros((0,), jnp.float32)
    style_proj = jnp.dot(style_features.astype(jnp.float32), params["ws"],
                         preferred_element_type=jnp.float32) + params["b1"]
    emb = jnp.take(params["emb_table"], phoneme_ids, axis=0)       # bf16
    sp = jnp.take(style_proj, word_idx, axis=0)                    # f32
    h = jnp.tanh(jnp.dot(emb, params["w1"],
                         preferred_element_type=jnp.float32) + sp)
    frames = jnp.tanh(jnp.dot(h.astype(jnp.bfloat16), params["wo"],
                              preferred_element_type=jnp.float32) + params["bo"])
    return frames.reshape(-1)


# ---------------------------------------------------------------------------
if __name__ == "__main__":
    import numpy as np

    key = jax.random.PRNGKey(0)
    k_params, k_style = jax.random.split(key)

    params = init_params(k_params)

    text = "hello world from kokoro"
    num_words = len(text.split())
    style_features = jax.random.normal(k_style, (num_words, STYLE), jnp.float32)

    audio = kokoro_wrapper_forward(text, style_features, params)
    audio = jax.block_until_ready(audio)

    assert audio.ndim == 1
    assert audio.dtype == jnp.float32
    assert audio.shape[0] == 20 * FRAME              # 20 phonemes in the example
    assert bool(jnp.all(jnp.isfinite(audio)))

    # Numerical check vs pure-JAX reference (same bf16 matmul path; loose
    # tolerance accounts for the f32-emulated one-hot selects).
    ref = jax.block_until_ready(reference_forward(text, style_features, params))
    np.testing.assert_allclose(np.asarray(audio), np.asarray(ref),
                               atol=2e-2, rtol=0)

    print("KERNEL_OK")
</pallas_src>

<mosaic_0001>
module attributes {stable_mosaic.version = 11 : i64} {
  func.func @synth_kernel(%arg0: i32, %arg1: memref<32x1xi32, #tpu.memory_space<vmem>>, %arg2: memref<32x1xi32, #tpu.memory_space<vmem>>, %arg3: memref<64x128xbf16, #tpu.memory_space<vmem>>, %arg4: memref<8x128xf32, #tpu.memory_space<vmem>>, %arg5: memref<128x128xbf16, #tpu.memory_space<vmem>>, %arg6: memref<128x128xbf16, #tpu.memory_space<vmem>>, %arg7: memref<1x128xf32, #tpu.memory_space<vmem>>, %arg8: memref<32x128xf32, #tpu.memory_space<vmem>>) attributes {dimension_semantics = [#tpu.dimension_semantics<parallel>], iteration_bounds = array<i64: 1>, scalar_prefetch = 0 : i64, scratch_operands = 0 : i64, tpu.core_type = #tpu.core_type<tc>, window_params = [{transform_indices = @transform_0, window_bounds = array<i64: 32, 1>}, {transform_indices = @transform_1, window_bounds = array<i64: 32, 1>}, {pipeline_mode = #tpu.pipeline_mode<synchronous>, transform_indices = @transform_2, window_bounds = array<i64: 64, 128>}, {pipeline_mode = #tpu.pipeline_mode<synchronous>, transform_indices = @transform_3, window_bounds = array<i64: 8, 128>}, {pipeline_mode = #tpu.pipeline_mode<synchronous>, transform_indices = @transform_4, window_bounds = array<i64: 128, 128>}, {pipeline_mode = #tpu.pipeline_mode<synchronous>, transform_indices = @transform_5, window_bounds = array<i64: 128, 128>}, {pipeline_mode = #tpu.pipeline_mode<synchronous>, transform_indices = @transform_6, window_bounds = array<i64: 1, 128>}, {transform_indices = @transform_7, window_bounds = array<i64: 32, 128>}]} {
    %c0 = arith.constant 0 : index
    %c0_0 = arith.constant 0 : index
    %0 = vector.load %arg1[%c0, %c0_0] : memref<32x1xi32, #tpu.memory_space<vmem>>, vector<32x1xi32>
    %c0_1 = arith.constant 0 : index
    %c0_2 = arith.constant 0 : index
    %1 = vector.load %arg2[%c0_1, %c0_2] : memref<32x1xi32, #tpu.memory_space<vmem>>, vector<32x1xi32>
    %2 = tpu.iota {dimensions = array<i32: 1>} : vector<32x64xi32>
    %3 = vector.broadcast %0 : vector<32x1xi32> to vector<32x64xi32>
    %4 = arith.cmpi eq, %2, %3 : vector<32x64xi32>
    %5 = arith.extui %4 : vector<32x64xi1> to vector<32x64xi32>
    %6 = arith.sitofp %5 : vector<32x64xi32> to vector<32x64xf32>
    %7 = arith.truncf %6 : vector<32x64xf32> to vector<32x64xbf16>
    %c0_3 = arith.constant 0 : index
    %c0_4 = arith.constant 0 : index
    %8 = vector.load %arg3[%c0_3, %c0_4] : memref<64x128xbf16, #tpu.memory_space<vmem>>, vector<64x128xbf16>
    %cst = arith.constant dense<0.000000e+00> : vector<32x128xf32>
    %9 = tpu.matmul %7, %8, %cst {dimension_numbers = #tpu.dot_dimension_numbers<[1], [0], [0], [1], [0, 0, 1, 1], [], []>} : vector<32x64xbf16>, vector<64x128xbf16>, vector<32x128xf32> -> vector<32x128xf32>
    %10 = tpu.iota {dimensions = array<i32: 1>} : vector<32x8xi32>
    %11 = vector.broadcast %1 : vector<32x1xi32> to vector<32x8xi32>
    %12 = arith.cmpi eq, %10, %11 : vector<32x8xi32>
    %13 = arith.extui %12 : vector<32x8xi1> to vector<32x8xi32>
    %14 = arith.sitofp %13 : vector<32x8xi32> to vector<32x8xf32>
    %c0_5 = arith.constant 0 : index
    %c0_6 = arith.constant 0 : index
    %15 = vector.load %arg4[%c0_5, %c0_6] : memref<8x128xf32, #tpu.memory_space<vmem>>, vector<8x128xf32>
    %cst_7 = arith.constant dense<0.000000e+00> : vector<32x128xf32>
    %16 = tpu.matmul %14, %15, %cst_7 {dimension_numbers = #tpu.dot_dimension_numbers<[1], [0], [0], [1], [0, 0, 1, 1], [], []>} : vector<32x8xf32>, vector<8x128xf32>, vector<32x128xf32> -> vector<32x128xf32>
    %17 = arith.truncf %9 : vector<32x128xf32> to vector<32x128xbf16>
    %c0_8 = arith.constant 0 : index
    %c0_9 = arith.constant 0 : index
    %18 = vector.load %arg5[%c0_8, %c0_9] : memref<128x128xbf16, #tpu.memory_space<vmem>>, vector<128x128xbf16>
    %cst_10 = arith.constant dense<0.000000e+00> : vector<32x128xf32>
    %19 = tpu.matmul %17, %18, %cst_10 {dimension_numbers = #tpu.dot_dimension_numbers<[1], [0], [0], [1], [0, 0, 1, 1], [], []>} : vector<32x128xbf16>, vector<128x128xbf16>, vector<32x128xf32> -> vector<32x128xf32>
    %20 = arith.addf %19, %16 : vector<32x128xf32>
    %21 = math.tanh %20 : vector<32x128xf32>
    %22 = arith.truncf %21 : vector<32x128xf32> to vector<32x128xbf16>
    %c0_11 = arith.constant 0 : index
    %c0_12 = arith.constant 0 : index
    %23 = vector.load %arg6[%c0_11, %c0_12] : memref<128x128xbf16, #tpu.memory_space<vmem>>, vector<128x128xbf16>
    %cst_13 = arith.constant dense<0.000000e+00> : vector<32x128xf32>
    %24 = tpu.matmul %22, %23, %cst_13 {dimension_numbers = #tpu.dot_dimension_numbers<[1], [0], [0], [1], [0, 0, 1, 1], [], []>} : vector<32x128xbf16>, vector<128x128xbf16>, vector<32x128xf32> -> vector<32x128xf32>
    %c0_14 = arith.constant 0 : index
    %c0_15 = arith.constant 0 : index
    %25 = vector.load %arg7[%c0_14, %c0_15] : memref<1x128xf32, #tpu.memory_space<vmem>>, vector<1x128xf32>
    %26 = vector.broadcast %25 : vector<1x128xf32> to vector<32x128xf32>
    %27 = arith.addf %24, %26 : vector<32x128xf32>
    %28 = math.tanh %27 : vector<32x128xf32>
    %c0_16 = arith.constant 0 : index
    %c0_17 = arith.constant 0 : index
    %29 = vector.load %arg8[%c0_16, %c0_17] : memref<32x128xf32, #tpu.memory_space<vmem>>, vector<32x128xf32>
    tpu.vector_store %arg8[%c0_16, %c0_17], %28 {strides = array<i32>} : memref<32x128xf32, #tpu.memory_space<vmem>>, vector<32x128xf32>,
    return
  }
  func.func @transform_0(%arg0: i32) -> (i32, i32) {
    %c0_i32 = arith.constant 0 : i32
    %c0_i32_0 = arith.constant 0 : i32
    return %arg0, %c0_i32 : i32, i32
  }
  func.func @transform_1(%arg0: i32) -> (i32, i32) {
    %c0_i32 = arith.constant 0 : i32
    %c0_i32_0 = arith.constant 0 : i32
    return %arg0, %c0_i32 : i32, i32
  }
  func.func @transform_2(%arg0: i32) -> (i32, i32) {
    %c0_i32 = arith.constant 0 : i32
    %c0_i32_0 = arith.constant 0 : i32
    %c0_i32_1 = arith.constant 0 : i32
    return %c0_i32, %c0_i32_0 : i32, i32
  }
  func.func @transform_3(%arg0: i32) -> (i32, i32) {
    %c0_i32 = arith.constant 0 : i32
    %c0_i32_0 = arith.constant 0 : i32
    %c0_i32_1 = arith.constant 0 : i32
    return %c0_i32, %c0_i32_0 : i32, i32
  }
  func.func @transform_4(%arg0: i32) -> (i32, i32) {
    %c0_i32 = arith.constant 0 : i32
    %c0_i32_0 = arith.constant 0 : i32
    %c0_i32_1 = arith.constant 0 : i32
    return %c0_i32, %c0_i32_0 : i32, i32
  }
  func.func @transform_5(%arg0: i32) -> (i32, i32) {
    %c0_i32 = arith.constant 0 : i32
    %c0_i32_0 = arith.constant 0 : i32
    %c0_i32_1 = arith.constant 0 : i32
    return %c0_i32, %c0_i32_0 : i32, i32
  }
  func.func @transform_6(%arg0: i32) -> (i32, i32) {
    %c0_i32 = arith.constant 0 : i32
    %c0_i32_0 = arith.constant 0 : i32
    %c0_i32_1 = arith.constant 0 : i32
    return %c0_i32, %c0_i32_0 : i32, i32
  }
  func.func @transform_7(%arg0: i32) -> (i32, i32) {
    %c0_i32 = arith.constant 0 : i32
    %c0_i32_0 = arith.constant 0 : i32
    return %arg0, %c0_i32 : i32, i32
  }
}

</mosaic_0001>

<llo_original>
// kernel: tpu_custom_call.1
$region0: #{tpu_custom_call.1}
  #allocation0 [shape = 'u32[]', space=smem, size = 0x4, offset = 0x4, fixed_abs, tag = 'smem constant byte address 0x4 - core index']
  #allocation1 [shape = 'u32[72,128]{1,0:T(1,128)}', space=vmem, size = 0x9000, scoped, tag = 'internal scratch']
  %s0 = inlined_call_operand.vmem [shape: s32[32,1], index: 0, kind: input, shape index: {}]
  %s1 = inlined_call_operand.vmem [shape: s32[32,1], index: 1, kind: input, shape index: {}]
  %s2 = inlined_call_operand.hbm [shape: bf16[64,128], index: 2, kind: input, shape index: {}]
  %s3 = inlined_call_operand.hbm [shape: f32[8,128], index: 3, kind: input, shape index: {}]
  %s4 = inlined_call_operand.vmem [shape: bf16[128,128], index: 4, kind: input, shape index: {}]
  %s5 = inlined_call_operand.hbm [shape: bf16[128,128], index: 5, kind: input, shape index: {}]
  %s6 = inlined_call_operand.vmem [shape: f32[1,128], index: 6, kind: input, shape index: {}]
  %s7 = inlined_call_operand.hbm [shape: f32[32,128], index: 7, kind: output, shape index: {}]
  %s8 = sld [smem:[#allocation0]]
  $region50: #{tpu_custom_call.1} parent=0
    _
  %s10 = ssub.s32 1, %s8
  %s11 = scalar_select 0, %s10, %s8
  $region1: #{tpu_custom_call.1} parent=0
    #allocation2 [shape = 'u8[16384]{0}', space=vmem, size = 0x4000, scoped, tag = 'input window, operand 2, single buffered']
    #allocation3 [shape = 's32[1]{0}', space=sflag, size = 0x4, scoped, tag = 'scoped memory for tpu_custom_call.1']
    #allocation4 [shape = 's32[1]{0}', space=sflag, size = 0x4, scoped, tag = 'scoped memory for tpu_custom_call.1']
    #allocation5 [shape = 'u8[4096]{0}', space=vmem, size = 0x1000, scoped, tag = 'input window, operand 3, single buffered']
    #allocation6 [shape = 's32[1]{0}', space=sflag, size = 0x4, scoped, tag = 'scoped memory for tpu_custom_call.1']
    #allocation7 [shape = 'u8[32768]{0}', space=vmem, size = 0x8000, scoped, tag = 'input window, operand 5, single buffered']
    #allocation8 [shape = 'u8[16384]{0}', space=vmem, size = 0x4000, scoped, tag = 'output window, operand 0, single buffered']
    %12 = vsyncpa [#allocation3], 0
    %13 = vsyncpa [#allocation6], 0
    %14 = vsyncpa [#allocation4], 0
    // Predicated region
    $region2: #{tpu_custom_call.1} parent=1 // pred_check
      _
    $region3: #{tpu_custom_call.1} parent=1 // pred_check_branch
      %16 = sbr.rel (0) target = $region5
    $region4: #{tpu_custom_call.1} parent=1 // pred_region
      _
    $region5: #{tpu_custom_call.1} parent=1 // pred_fallthru
      _
    // Predicated region
    $region6: #{tpu_custom_call.1} parent=1 // pred_check
      _
    $region7: #{tpu_custom_call.1} parent=1 // pred_check_branch
      %18 = sbr.rel (0) target = $region9
    $region8: #{tpu_custom_call.1} parent=1 // pred_region
      _
    $region9: #{tpu_custom_call.1} parent=1 // pred_fallthru
      _
    // Predicated region
    $region10: #{tpu_custom_call.1} parent=1 // pred_check
      _
    $region11: #{tpu_custom_call.1} parent=1 // pred_check_branch
      %20 = sbr.rel (0) target = $region13
    $region12: #{tpu_custom_call.1} parent=1 // pred_region
      %22 = vsyncadd [#allocation3], 0
      %s23 = sshll.u32 %s2, 4
      %s24 = int_to_ptr.hbm [resolvable:$true] %s23
      %s25 = sshll.u32 [#allocation2], 4
      %s26 = int_to_ptr.vmem [resolvable:$true] %s25
      %31 = dma.hbm_to_vmem [thread:$0]  %s24, 512, %s26, [#allocation3], 64, 64, 4
    $region13: #{tpu_custom_call.1} parent=1 // pred_fallthru
      _
    // Predicated region
    $region14: #{tpu_custom_call.1} parent=1 // pred_check
      _
    $region15: #{tpu_custom_call.1} parent=1 // pred_check_branch
      %33 = sbr.rel (0) target = $region17
    $region16: #{tpu_custom_call.1} parent=1 // pred_region
      %35 = vsyncadd [#allocation6], 0
      %s37 = sshll.u32 %s3, 4
      %s38 = int_to_ptr.hbm [resolvable:$true] %s37
      %s39 = sshll.u32 [#allocation5], 4
      %s40 = int_to_ptr.vmem [resolvable:$true] %s39
      %42 = dma.hbm_to_vmem [thread:$0]  %s38, 128, %s40, [#allocation6]
    $region17: #{tpu_custom_call.1} parent=1 // pred_fallthru
      _
    // Predicated region
    $region18: #{tpu_custom_call.1} parent=1 // pred_check
      _
    $region19: #{tpu_custom_call.1} parent=1 // pred_check_branch
      %44 = sbr.rel (0) target = $region21
    $region20: #{tpu_custom_call.1} parent=1 // pred_region
      _
    $region21: #{tpu_custom_call.1} parent=1 // pred_fallthru
      _
    // Predicated region
    $region22: #{tpu_custom_call.1} parent=1 // pred_check
      _
    $region23: #{tpu_custom_call.1} parent=1 // pred_check_branch
      %46 = sbr.rel (0) target = $region25
    $region24: #{tpu_custom_call.1} parent=1 // pred_region
      %48 = vsyncadd [#allocation6], 0
      %s49 = sshll.u32 %s5, 4
      %s50 = int_to_ptr.hbm [resolvable:$true] %s49
      %s51 = sshll.u32 [#allocation7], 4
      %s52 = int_to_ptr.vmem [resolvable:$true] %s51
      %57 = dma.hbm_to_vmem [thread:$0]  %s50, 1024, %s52, [#allocation6], 64, 64, 4
    $region25: #{tpu_custom_call.1} parent=1 // pred_fallthru
      _
    // Predicated region
    $region26: #{tpu_custom_call.1} parent=1 // pred_check
      _
    $region27: #{tpu_custom_call.1} parent=1 // pred_check_branch
      %59 = sbr.rel (0) target = $region29
    $region28: #{tpu_custom_call.1} parent=1 // pred_region
      _
    $region29: #{tpu_custom_call.1} parent=1 // pred_fallthru
      _
    // Predicated region
    $region30: #{tpu_custom_call.1} parent=1 // pred_check
      _
    $region31: #{tpu_custom_call.1} parent=1 // pred_check_branch
      %61 = sbr.rel (0) target = $region33
    $region32: #{tpu_custom_call.1} parent=1 // pred_region
      %63 = dma.done [#allocation3], 512
    $region33: #{tpu_custom_call.1} parent=1 // pred_fallthru
      _
    // Predicated region
    $region34: #{tpu_custom_call.1} parent=1 // pred_check
      _
    $region35: #{tpu_custom_call.1} parent=1 // pred_check_branch
      %65 = sbr.rel (0) target = $region37
    $region36: #{tpu_custom_call.1} parent=1 // pred_region
      %67 = dma.done [#allocation6], 128
    $region37: #{tpu_custom_call.1} parent=1 // pred_fallthru
      _
    // Predicated region
    $region38: #{tpu_custom_call.1} parent=1 // pred_check
      _
    $region39: #{tpu_custom_call.1} parent=1 // pred_check_branch
      %69 = sbr.rel (0) target = $region41
    $region40: #{tpu_custom_call.1} parent=1 // pred_region
      %71 = dma.done [#allocation6], 1024
    $region41: #{tpu_custom_call.1} parent=1 // pred_fallthru
      _
    %v73 = vld [vmem:[%s0] sm:$0xff]
    %v74 = vld [vmem:[%s0 + $0x8] sm:$0xff]
    %v75 = vld [vmem:[%s0 + $0x10] sm:$0xff]
    %v76 = vld [vmem:[%s0 + $0x18] sm:$0xff]
    %v77 = vld [vmem:[%s1] sm:$0xff]
    %v78 = vld [vmem:[%s1 + $0x8] sm:$0xff]
    %v79 = vld [vmem:[%s1 + $0x10] sm:$0xff]
    %v80 = vld [vmem:[%s1 + $0x18] sm:$0xff]
    %v81 = vlaneseq
    %v82 = vand.u32 %v81, 127
    %83 = vset.pattern.permute.xlu0 0
    %84 = vperm.xlu0 %83, %v73
    %v85 = vpop.permute.xlu0 %84
    %86 = vset.pattern.permute.xlu0 0
    %87 = vperm.xlu0 %86, %v74
    %v88 = vpop.permute.xlu0 %87
    %89 = vset.pattern.permute.xlu0 0
    %90 = vperm.xlu0 %89, %v75
    %v91 = vpop.permute.xlu0 %90
    %92 = vset.pattern.permute.xlu0 0
    %93 = vperm.xlu0 %92, %v76
    %v94 = vpop.permute.xlu0 %93
    %vm95 = vcmp.eq.s32.totalorder %v82, %v85
    %vm96 = vcmp.eq.s32.totalorder %v82, %v88
    %vm97 = vcmp.eq.s32.totalorder %v82, %v91
    %vm98 = vcmp.eq.s32.totalorder %v82, %v94
    %v99 = vsel %vm95, 1, 0
    %v100 = vsel %vm96, 1, 0
    %v101 = vsel %vm97, 1, 0
    %v102 = vsel %vm98, 1, 0
    %v103 = vcvt.s32.f32 %v99
    %v104 = vcvt.s32.f32 %v100
    %v105 = vcvt.s32.f32 %v101
    %v106 = vcvt.s32.f32 %v102
    %v107 = vpack.c.bf16 %v104, %v103
    %v108 = vpack.c.bf16 %v106, %v105
    %v109 = vld [vmem:[#allocation2] sm:$0xf]
    %v110 = vld [vmem:[#allocation2 + $0x4] sm:$0xf]
    %v111 = vld [vmem:[#allocation2 + $0x8] sm:$0xf]
    %v112 = vld [vmem:[#allocation2 + $0xc] sm:$0xf]
    %v113 = vld [vmem:[#allocation2 + $0x10] sm:$0xf]
    %v114 = vld [vmem:[#allocation2 + $0x14] sm:$0xf]
    %v115 = vld [vmem:[#allocation2 + $0x18] sm:$0xf]
    %v116 = vld [vmem:[#allocation2 + $0x1c] sm:$0xf]
    %v125 = vunpack.c.l.b16 %v109
    %v126 = vunpack.c.l.b16 %v110
    %v127 = vunpack.c.l.b16 %v111
    %v128 = vunpack.c.l.b16 %v112
    %v129 = vunpack.c.l.b16 %v113
    %v130 = vunpack.c.l.b16 %v114
    %v131 = vunpack.c.l.b16 %v115
    %v132 = vunpack.c.l.b16 %v116
    %v133 = vpack.c.b16 %v126, %v125
    %v134 = vpack.c.b16 %v128, %v127
    %v135 = vpack.c.b16 %v130, %v129
    %v136 = vpack.c.b16 %v132, %v131
    %vm141 = vcmask 523264
    %v143 = vsel %vm141, %v107, 0
    %v146 = vsel %vm141, %v108, 0
    %148 = vmatpush.bf16.msra.mxu0 0
    %149 = vmatpush.bf16.msra.mxu0 0
    %150 = vmatpush.bf16.msra.mxu0 0
    %151 = vmatpush.bf16.msra.mxu0 0
    %152 = vmatpush.bf16.msra.mxu0 %v136
    %153 = vmatpush.bf16.msra.mxu0 %v135
    %154 = vmatpush.bf16.msra.mxu0 %v134
    %155 = vmatpush.bf16.msra.mxu0 %v133
    %156 = vmatmul.bf16.gmra.mxu0 %v143
    %v157 = vpop.f32.mrf.mxu0
    %v158 = vadd.f32 0.0, %v157
    %v159 = vpop.f32.mrf.mxu0
    %v160 = vadd.f32 0.0, %v159
    %161 = vmatmul.bf16.gmra.mxu0 %v146
    %v162 = vpop.f32.mrf.mxu0
    %v163 = vadd.f32 0.0, %v162
    %v164 = vpop.f32.mrf.mxu0
    %v165 = vadd.f32 0.0, %v164
    %166 = vdwg.mxu0
    %167 = vset.pattern.permute.xlu0 0
    %168 = vperm.xlu0 %167, %v77
    %v169 = vpop.permute.xlu0 %168
    %170 = vset.pattern.permute.xlu0 0
    %171 = vperm.xlu0 %170, %v78
    %v172 = vpop.permute.xlu0 %171
    %173 = vset.pattern.permute.xlu0 0
    %174 = vperm.xlu0 %173, %v79
    %v175 = vpop.permute.xlu0 %174
    %176 = vset.pattern.permute.xlu0 0
    %177 = vperm.xlu0 %176, %v80
    %v178 = vpop.permute.xlu0 %177
    %vm179 = vcmp.eq.s32.totalorder %v82, %v169
    %vm180 = vcmp.eq.s32.totalorder %v82, %v172
    %vm181 = vcmp.eq.s32.totalorder %v82, %v175
    %vm182 = vcmp.eq.s32.totalorder %v82, %v178
    %v183 = vsel %vm179, 1, 0
    %v184 = vsel %vm180, 1, 0
    %v185 = vsel %vm181, 1, 0
    %v186 = vsel %vm182, 1, 0
    %v187 = vcvt.s32.f32 %v183
    %v188 = vcvt.s32.f32 %v184
    %v189 = vcvt.s32.f32 %v185
    %v190 = vcvt.s32.f32 %v186
    %v191 = vld [vmem:[#allocation5] sm:$0xff]
    %vm192 = vcmask 64512
    %v194 = vsel %vm192, %v187, 0
    %v197 = vsel %vm192, %v188, 0
    %v200 = vsel %vm192, %v189, 0
    %v203 = vsel %vm192, %v190, 0
    %205 = vmatpush.msra.mxu0 0.0
    %206 = vmatpush.msra.mxu0 0.0
    %207 = vmatpush.msra.mxu0 0.0
    %208 = vmatpush.msra.mxu0 0.0
    %209 = vmatpush.msra.mxu0 0.0
    %210 = vmatpush.msra.mxu0 0.0
    %211 = vmatpush.msra.mxu0 0.0
    %212 = vmatpush.msra.mxu0 0.0
    %213 = vmatpush.msra.mxu0 0.0
    %214 = vmatpush.msra.mxu0 0.0
    %215 = vmatpush.msra.mxu0 0.0
    %216 = vmatpush.msra.mxu0 0.0
    %217 = vmatpush.msra.mxu0 0.0
    %218 = vmatpush.msra.mxu0 0.0
    %219 = vmatpush.msra.mxu0 0.0
    %220 = vmatpush.msra.mxu0 %v191
    %221 = vmatmul.f32.gmra.mxu0 %v194
    %v222 = vpop.f32.mrf.mxu0
    %v223 = vadd.f32 0.0, %v222
    %224 = vmatmul.f32.gmra.mxu0 %v197
    %v225 = vpop.f32.mrf.mxu0
    %v226 = vadd.f32 0.0, %v225
    %227 = vmatmul.f32.gmra.mxu0 %v200
    %v228 = vpop.f32.mrf.mxu0
    %v229 = vadd.f32 0.0, %v228
    %230 = vmatmul.f32.gmra.mxu0 %v203
    %v231 = vpop.f32.mrf.mxu0
    %v232 = vadd.f32 0.0, %v231
    %233 = vdwg.mxu0
    %v234 = vpack.c.bf16 %v160, %v158
    %v235 = vpack.c.bf16 %v165, %v163
    %v236 = vld [vmem:[%s4] sm:$0xf]
    %v237 = vld [vmem:[%s4 + $0x4] sm:$0xf]
    %v238 = vld [vmem:[%s4 + $0x8] sm:$0xf]
    %v239 = vld [vmem:[%s4 + $0xc] sm:$0xf]
    %v240 = vld [vmem:[%s4 + $0x10] sm:$0xf]
    %v241 = vld [vmem:[%s4 + $0x14] sm:$0xf]
    %v242 = vld [vmem:[%s4 + $0x18] sm:$0xf]
    %v243 = vld [vmem:[%s4 + $0x1c] sm:$0xf]
    %v244 = vld [vmem:[%s4 + $0x20] sm:$0xf]
    %v245 = vld [vmem:[%s4 + $0x24] sm:$0xf]
    %v246 = vld [vmem:[%s4 + $0x28] sm:$0xf]
    %v247 = vld [vmem:[%s4 + $0x2c] sm:$0xf]
    %v248 = vld [vmem:[%s4 + $0x30] sm:$0xf]
    %v249 = vld [vmem:[%s4 + $0x34] sm:$0xf]
    %v250 = vld [vmem:[%s4 + $0x38] sm:$0xf]
    %v251 = vld [vmem:[%s4 + $0x3c] sm:$0xf]
    %v268 = vunpack.c.l.b16 %v236
    %v269 = vunpack.c.l.b16 %v237
    %v270 = vunpack.c.l.b16 %v238
    %v271 = vunpack.c.l.b16 %v239
    %v272 = vunpack.c.l.b16 %v240
    %v273 = vunpack.c.l.b16 %v241
    %v274 = vunpack.c.l.b16 %v242
    %v275 = vunpack.c.l.b16 %v243
    %v276 = vunpack.c.l.b16 %v244
    %v277 = vunpack.c.l.b16 %v245
    %v278 = vunpack.c.l.b16 %v246
    %v279 = vunpack.c.l.b16 %v247
    %v280 = vunpack.c.l.b16 %v248
    %v281 = vunpack.c.l.b16 %v249
    %v282 = vunpack.c.l.b16 %v250
    %v283 = vunpack.c.l.b16 %v251
    %v284 = vpack.c.b16 %v269, %v268
    %v285 = vpack.c.b16 %v271, %v270
    %v286 = vpack.c.b16 %v273, %v272
    %v287 = vpack.c.b16 %v275, %v274
    %v288 = vpack.c.b16 %v277, %v276
    %v289 = vpack.c.b16 %v279, %v278
    %v290 = vpack.c.b16 %v281, %v280
    %v291 = vpack.c.b16 %v283, %v282
    %300 = vmatpush.bf16.msra.mxu0 %v291
    %301 = vmatpush.bf16.msra.mxu0 %v290
    %302 = vmatpush.bf16.msra.mxu0 %v289
    %303 = vmatpush.bf16.msra.mxu0 %v288
    %304 = vmatpush.bf16.msra.mxu0 %v287
    %305 = vmatpush.bf16.msra.mxu0 %v286
    %306 = vmatpush.bf16.msra.mxu0 %v285
    %307 = vmatpush.bf16.msra.mxu0 %v284
    %308 = vmatmul.bf16.gmra.mxu0 %v234
    %v309 = vpop.f32.mrf.mxu0
    %v310 = vadd.f32 %v223, %v309
    %v311 = vpop.f32.mrf.mxu0
    %v312 = vadd.f32 %v226, %v311
    %313 = vmatmul.bf16.gmra.mxu0 %v235
    %v314 = vpop.f32.mrf.mxu0
    %v315 = vadd.f32 %v229, %v314
    %v316 = vpop.f32.mrf.mxu0
    %v317 = vadd.f32 %v232, %v316
    %318 = vdwg.mxu0
    %v319 = vtanh.pop %v310
    %v320 = vtanh.pop %v312
    %v321 = vtanh.pop %v315
    %v322 = vtanh.pop %v317
    %v323 = vpack.c.bf16 %v320, %v319
    %v324 = vpack.c.bf16 %v322, %v321
    %v325 = vld [vmem:[#allocation7] sm:$0xf]
    %v326 = vld [vmem:[#allocation7 + $0x4] sm:$0xf]
    %v327 = vld [vmem:[#allocation7 + $0x8] sm:$0xf]
    %v328 = vld [vmem:[#allocation7 + $0xc] sm:$0xf]
    %v329 = vld [vmem:[#allocation7 + $0x10] sm:$0xf]
    %v330 = vld [vmem:[#allocation7 + $0x14] sm:$0xf]
    %v331 = vld [vmem:[#allocation7 + $0x18] sm:$0xf]
    %v332 = vld [vmem:[#allocation7 + $0x1c] sm:$0xf]
    %v333 = vld [vmem:[#allocation7 + $0x20] sm:$0xf]
    %v334 = vld [vmem:[#allocation7 + $0x24] sm:$0xf]
    %v335 = vld [vmem:[#allocation7 + $0x28] sm:$0xf]
    %v336 = vld [vmem:[#allocation7 + $0x2c] sm:$0xf]
    %v337 = vld [vmem:[#allocation7 + $0x30] sm:$0xf]
    %v338 = vld [vmem:[#allocation7 + $0x34] sm:$0xf]
    %v339 = vld [vmem:[#allocation7 + $0x38] sm:$0xf]
    %v340 = vld [vmem:[#allocation7 + $0x3c] sm:$0xf]
    %v341 = vld [vmem:[%s6] sm:$0x1]
    %v343 = vperm.slane %v341, 0
    %v361 = vunpack.c.l.b16 %v325
    %v362 = vunpack.c.l.b16 %v326
    %v363 = vunpack.c.l.b16 %v327
    %v364 = vunpack.c.l.b16 %v328
    %v365 = vunpack.c.l.b16 %v329
    %v366 = vunpack.c.l.b16 %v330
    %v367 = vunpack.c.l.b16 %v331
    %v368 = vunpack.c.l.b16 %v332
    %v369 = vunpack.c.l.b16 %v333
    %v370 = vunpack.c.l.b16 %v334
    %v371 = vunpack.c.l.b16 %v335
    %v372 = vunpack.c.l.b16 %v336
    %v373 = vunpack.c.l.b16 %v337
    %v374 = vunpack.c.l.b16 %v338
    %v375 = vunpack.c.l.b16 %v339
    %v376 = vunpack.c.l.b16 %v340
    %v377 = vpack.c.b16 %v362, %v361
    %v378 = vpack.c.b16 %v364, %v363
    %v379 = vpack.c.b16 %v366, %v365
    %v380 = vpack.c.b16 %v368, %v367
    %v381 = vpack.c.b16 %v370, %v369
    %v382 = vpack.c.b16 %v372, %v371
    %v383 = vpack.c.b16 %v374, %v373
    %v384 = vpack.c.b16 %v376, %v375
    %393 = vmatpush.bf16.msra.mxu0 %v384
    %394 = vmatpush.bf16.msra.mxu0 %v383
    %395 = vmatpush.bf16.msra.mxu0 %v382
    %396 = vmatpush.bf16.msra.mxu0 %v381
    %397 = vmatpush.bf16.msra.mxu0 %v380
    %398 = vmatpush.bf16.msra.mxu0 %v379
    %399 = vmatpush.bf16.msra.mxu0 %v378
    %400 = vmatpush.bf16.msra.mxu0 %v377
    %401 = vmatmul.bf16.gmra.mxu0 %v323
    %v402 = vpop.f32.mrf.mxu0
    %v403 = vadd.f32 %v343, %v402
    %v404 = vpop.f32.mrf.mxu0
    %v405 = vadd.f32 %v343, %v404
    %406 = vmatmul.bf16.gmra.mxu0 %v324
    %v407 = vpop.f32.mrf.mxu0
    %v408 = vadd.f32 %v343, %v407
    %v409 = vpop.f32.mrf.mxu0
    %v410 = vadd.f32 %v343, %v409
    %411 = vdwg.mxu0
    %v412 = vtanh.pop %v403
    %v413 = vtanh.pop %v405
    %v414 = vtanh.pop %v408
    %v415 = vtanh.pop %v410
    %416 = vst [vmem:[#allocation8] sm:$0xff] %v412
    %417 = vst [vmem:[#allocation8 + $0x8] sm:$0xff] %v413
    %418 = vst [vmem:[#allocation8 + $0x10] sm:$0xff] %v414
    %419 = vst [vmem:[#allocation8 + $0x18] sm:$0xff] %v415
    // Predicated region
    $region42: #{tpu_custom_call.1} parent=1 // pred_check
      _
    $region43: #{tpu_custom_call.1} parent=1 // pred_check_branch
      %421 = sbr.rel (0) target = $region45
    $region44: #{tpu_custom_call.1} parent=1 // pred_region
      %423 = vsyncadd [#allocation4], 0
      %s424 = sshll.u32 [#allocation8], 4
      %s425 = int_to_ptr.vmem [resolvable:$true] %s424
      %s426 = sshll.u32 %s7, 4
      %s427 = int_to_ptr.hbm [resolvable:$true] %s426
      %432 = dma.vmem_to_hbm [thread:$0]  %s425, 512, %s427, [#allocation4], 128, 128, 8
    $region45: #{tpu_custom_call.1} parent=1 // pred_fallthru
      _
    // Predicated region
    $region46: #{tpu_custom_call.1} parent=1 // pred_check
      _
    $region47: #{tpu_custom_call.1} parent=1 // pred_check_branch
      %434 = sbr.rel (0) target = $region49
    $region48: #{tpu_custom_call.1} parent=1 // pred_region
      %436 = dma.done [#allocation4], 512
    $region49: #{tpu_custom_call.1} parent=1 // pred_fallthru
      _
    %437 = vsyncpa [#allocation3], 1
    %438 = vsyncpa [#allocation6], 1
    %439 = vsyncpa [#allocation4], 1

</llo_original>
